<compile_context>
chip_gen: v7x
topology: tpu7x:2x2x1
jax: 0.10.0
libtpu: 0.0.40
codegen_flags: <defaults>
</compile_context>

<pallas_src>
import functools

import jax
import jax.numpy as jnp
from jax import lax
from jax.experimental import pallas as pl
from jax.experimental.pallas import tpu as pltpu

EPS = 1e-5   # PyTorch InstanceNorm1d default


def _round_up(n, m):
    return ((n + m - 1) // m) * m


def _instance_norm(h, gamma, beta):
    # Per-row normalization over the feature axis (biased variance), matching
    # nn.InstanceNorm1d(1, affine=True) applied to a (B, 1, F) tensor.
    # All math in f32 on the VPU/EUP.  gamma is folded into the per-row scale
    # (shape (tb, 1)) before the broadcasted multiply.
    f = h.shape[-1]
    inv_f = 1.0 / f
    mu = jnp.sum(h, axis=-1, keepdims=True) * inv_f
    hc = h - mu                                        # bind once
    var = jnp.sum(hc * hc, axis=-1, keepdims=True) * inv_f
    scale = lax.rsqrt(var + EPS) * gamma               # (tb, 1)
    return hc * scale + beta


def dni_kernel(gb_ref,          # SMEM (6,): [g0, b0, g1, b1, g2, b2]
               x_ref,           # VMEM (tb, D)  f32
               w1_ref, b1_ref,  # VMEM (D, H), (1, H)
               w2_ref, b2_ref,  # VMEM (H, H), (1, H)
               w3_ref, b3_ref,  # VMEM (H, O), (1, O)
               o_ref):          # VMEM (tb, O)  (input dtype)
    g0, be0 = gb_ref[0], gb_ref[1]
    g1, be1 = gb_ref[2], gb_ref[3]
    g2, be2 = gb_ref[4], gb_ref[5]

    x = x_ref[...].astype(jnp.float32)

    # layer1: InstanceNorm -> Linear -> ReLU -> InstanceNorm
    h = _instance_norm(x, g0, be0)
    h = jnp.dot(h.astype(w1_ref.dtype), w1_ref[...],
                preferred_element_type=jnp.float32) + b1_ref[...]
    h = jnp.maximum(h, 0.0)
    h = _instance_norm(h, g1, be1)

    # layer2: Linear -> ReLU -> InstanceNorm
    h = jnp.dot(h.astype(w2_ref.dtype), w2_ref[...],
                preferred_element_type=jnp.float32) + b2_ref[...]
    h = jnp.maximum(h, 0.0)
    h = _instance_norm(h, g2, be2)

    # layer3: Linear (unpadded O; masked store writes only the useful lanes)
    o = jnp.dot(h.astype(w3_ref.dtype), w3_ref[...],
                preferred_element_type=jnp.float32) + b3_ref[...]
    o_ref[...] = o.astype(o_ref.dtype)


def prepare_params(params, compute_dtype=None):
    """One-time param prep (outside jit): flatten gamma/beta, optional bf16 cast.

    Weights are cast once here instead of per-call inside the jitted forward
    (per-call casts re-read/re-write every weight in HBM on each invocation).
    Biases stay f32 since they are added to the f32 accumulator.
    """
    p = dict(params)
    p["gb"] = params["gb"].reshape(-1).astype(jnp.float32)     # (6,) 1-D SMEM
    if compute_dtype is not None:
        for k in ("w1", "w2", "w3"):
            p[k] = params[k].astype(compute_dtype)
    return p


@functools.partial(jax.jit, static_argnames=("tb",))
def dni_linear_forward(x, params, tb=None):
    B, D = x.shape
    w1, b1 = params["w1"], params["b1"]
    w2, b2 = params["w2"], params["b2"]
    w3, b3 = params["w3"], params["b3"]
    gb = params["gb"]                                   # (6,) f32 (prepared)
    H = w1.shape[1]
    O = w3.shape[1]
    out_dtype = x.dtype

    # Batch tile: >=2 grid steps when B > 8 (v7x megacore uses both TCs), and
    # avoid the 256<B<512 "pad up to 512" trap by splitting evenly.
    if tb is None:
        n_steps = max(2, pl.cdiv(B, 256)) if B > 8 else 1
        tb = min(256, _round_up(pl.cdiv(B, n_steps), 8))
    grid = (pl.cdiv(B, tb),)    # ragged last block handled by Pallas (no jnp.pad)

    # Weights: constant index_maps -> fetched once.  Single-buffer them when
    # they are big enough to matter for the VMEM budget (the demo-size weights
    # keep the default double-buffered path).
    weight_bytes = sum(int(a.size) * a.dtype.itemsize
                       for a in (w1, b1, w2, b2, w3, b3))
    single_buffer = weight_bytes > (4 << 20)
    wkwargs = dict(pipeline_mode=pl.Buffered(1)) if single_buffer else {}

    def wspec(shape):
        return pl.BlockSpec(shape, lambda i: (0, 0), **wkwargs)

    # Scoped-VMEM budget: weights (x1 or x2 buffers) + double-buffered x/out
    # tiles + ~3 live (tb, H) f32 intermediates, with headroom.  Clamped to a
    # range that is valid on v5e / v6e / v7x.
    buf_mult = 1 if single_buffer else 2
    vmem_need = (buf_mult * weight_bytes
                 + 2 * tb * D * x.dtype.itemsize
                 + 2 * tb * O * jnp.dtype(out_dtype).itemsize
                 + 3 * tb * H * 4)
    vmem_limit = int(min(max(int(vmem_need * 1.5) + (2 << 20), 32 << 20), 64 << 20))

    out = pl.pallas_call(
        dni_kernel,
        out_shape=jax.ShapeDtypeStruct((B, O), out_dtype),
        grid=grid,
        in_specs=[
            pl.BlockSpec(memory_space=pltpu.MemorySpace.SMEM),   # gb (6,)
            pl.BlockSpec((tb, D), lambda i: (i, 0)),             # x
            wspec((D, H)),                                       # w1
            wspec((1, H)),                                       # b1
            wspec((H, H)),                                       # w2
            wspec((1, H)),                                       # b2
            wspec((H, O)),                                       # w3
            wspec((1, O)),                                       # b3
        ],
        out_specs=pl.BlockSpec((tb, O), lambda i: (i, 0)),
        compiler_params=pltpu.CompilerParams(
            dimension_semantics=("parallel",),
            vmem_limit_bytes=vmem_limit),
    )(gb, x, w1, b1, w2, b2, w3, b3)
    return out


def init_params(key, input_dims, out_dims, dni_hidden_size):
    k1, k2, k3 = jax.random.split(key, 3)

    def linear_init(k, fan_in, fan_out):
        bound = 1.0 / jnp.sqrt(fan_in)
        kw, kb = jax.random.split(k)
        w = jax.random.uniform(kw, (fan_in, fan_out), jnp.float32, -bound, bound)
        b = jax.random.uniform(kb, (1, fan_out), jnp.float32, -bound, bound)
        return w, b

    w1, b1 = linear_init(k1, input_dims, dni_hidden_size)
    w2, b2 = linear_init(k2, dni_hidden_size, dni_hidden_size)
    w3, b3 = linear_init(k3, dni_hidden_size, out_dims)
    # nn.InstanceNorm1d(1, affine=True) init: gamma=1, beta=0 (3 norm layers).
    gb = jnp.tile(jnp.array([[1.0, 0.0]], jnp.float32), (3, 1))
    return dict(w1=w1, b1=b1, w2=w2, b2=b2, w3=w3, b3=b3, gb=gb)


def reference_forward(x, params):
    # Pure-JAX reference mirroring the PyTorch module (all f32).
    def inorm(h, g, b):
        mu = jnp.mean(h, axis=-1, keepdims=True)
        var = jnp.mean((h - mu) ** 2, axis=-1, keepdims=True)
        return (h - mu) / jnp.sqrt(var + EPS) * g + b

    gb = params["gb"]
    h = inorm(x, gb[0, 0], gb[0, 1])
    h = jnp.maximum(h @ params["w1"] + params["b1"], 0.0)
    h = inorm(h, gb[1, 0], gb[1, 1])
    h = jnp.maximum(h @ params["w2"] + params["b2"], 0.0)
    h = inorm(h, gb[2, 0], gb[2, 1])
    return h @ params["w3"] + params["b3"]


if __name__ == "__main__":
    B, INPUT_DIMS, OUT_DIMS, HIDDEN = 16, 32, 16, 128

    key = jax.random.PRNGKey(0)
    kx, kp = jax.random.split(key)
    x = jax.random.normal(kx, (B, INPUT_DIMS), jnp.float32)
    params = init_params(kp, INPUT_DIMS, OUT_DIMS, HIDDEN)

    # f32 path: tight check vs. pure-JAX reference (grid has 2 parallel steps).
    prep_f32 = prepare_params(params)
    out = dni_linear_forward(x, prep_f32)
    out = jax.block_until_ready(out)
    ref = reference_forward(x, params)
    assert out.shape == (B, OUT_DIMS)
    assert jnp.allclose(out, ref, atol=1e-4, rtol=1e-4), "f32 mismatch vs reference"

    # Ragged batch (B=13 -> partial last block, no wrapper-side padding) with
    # bf16 MXU weight operands (x stays f32; casts happen on the dot operands).
    prep_bf16 = prepare_params(params, compute_dtype=jnp.bfloat16)
    xr = jax.random.normal(kx, (13, INPUT_DIMS), jnp.float32)
    out_bf16 = dni_linear_forward(xr, prep_bf16)
    out_bf16 = jax.block_until_ready(out_bf16)
    ref_r = reference_forward(xr, params)
    assert out_bf16.shape == (13, OUT_DIMS)
    assert bool(jnp.all(jnp.isfinite(out_bf16)))
    assert float(jnp.max(jnp.abs(out_bf16 - ref_r))) < 0.25, "bf16 path too far off"

    print("KERNEL_OK")
</pallas_src>

<mosaic_0001>
module attributes {stable_mosaic.version = 11 : i64} {
  func.func @dni_kernel(%arg0: i32, %arg1: memref<6xf32, #tpu.memory_space<smem>>, %arg2: memref<8x32xf32, #tpu.memory_space<vmem>>, %arg3: memref<32x128xf32, #tpu.memory_space<vmem>>, %arg4: memref<1x128xf32, #tpu.memory_space<vmem>>, %arg5: memref<128x128xf32, #tpu.memory_space<vmem>>, %arg6: memref<1x128xf32, #tpu.memory_space<vmem>>, %arg7: memref<128x16xf32, #tpu.memory_space<vmem>>, %arg8: memref<1x16xf32, #tpu.memory_space<vmem>>, %arg9: memref<8x16xf32, #tpu.memory_space<vmem>>) attributes {dimension_semantics = [#tpu.dimension_semantics<parallel>], iteration_bounds = array<i64: 2>, scalar_prefetch = 0 : i64, scratch_operands = 0 : i64, tpu.core_type = #tpu.core_type<tc>, window_params = [{transform_indices = @transform_0, window_bounds = array<i64: 6>}, {transform_indices = @transform_1, window_bounds = array<i64: 8, 32>}, {pipeline_mode = #tpu.pipeline_mode<synchronous>, transform_indices = @transform_2, window_bounds = array<i64: 32, 128>}, {pipeline_mode = #tpu.pipeline_mode<synchronous>, transform_indices = @transform_3, window_bounds = array<i64: 1, 128>}, {pipeline_mode = #tpu.pipeline_mode<synchronous>, transform_indices = @transform_4, window_bounds = array<i64: 128, 128>}, {pipeline_mode = #tpu.pipeline_mode<synchronous>, transform_indices = @transform_5, window_bounds = array<i64: 1, 128>}, {pipeline_mode = #tpu.pipeline_mode<synchronous>, transform_indices = @transform_6, window_bounds = array<i64: 128, 16>}, {pipeline_mode = #tpu.pipeline_mode<synchronous>, transform_indices = @transform_7, window_bounds = array<i64: 1, 16>}, {transform_indices = @transform_8, window_bounds = array<i64: 8, 16>}]} {
    %c0 = arith.constant 0 : index
    %0 = memref.load %arg1[%c0] : memref<6xf32, #tpu.memory_space<smem>>
    %c1 = arith.constant 1 : index
    %1 = memref.load %arg1[%c1] : memref<6xf32, #tpu.memory_space<smem>>
    %c2 = arith.constant 2 : index
    %2 = memref.load %arg1[%c2] : memref<6xf32, #tpu.memory_space<smem>>
    %c3 = arith.constant 3 : index
    %3 = memref.load %arg1[%c3] : memref<6xf32, #tpu.memory_space<smem>>
    %c4 = arith.constant 4 : index
    %4 = memref.load %arg1[%c4] : memref<6xf32, #tpu.memory_space<smem>>
    %c5 = arith.constant 5 : index
    %5 = memref.load %arg1[%c5] : memref<6xf32, #tpu.memory_space<smem>>
    %c0_0 = arith.constant 0 : index
    %c0_1 = arith.constant 0 : index
    %6 = vector.load %arg2[%c0_0, %c0_1] : memref<8x32xf32, #tpu.memory_space<vmem>>, vector<8x32xf32>
    %cst = arith.constant dense<0.000000e+00> : vector<8xf32>
    %7 = vector.multi_reduction <add>, %6, %cst [1] : vector<8x32xf32> to vector<8xf32>
    %8 = vector.shape_cast %7 : vector<8xf32> to vector<8x1xf32>
    %cst_2 = arith.constant 3.125000e-02 : f32
    %9 = vector.broadcast %cst_2 : f32 to vector<8x1xf32>
    %10 = arith.mulf %8, %9 : vector<8x1xf32>
    %11 = vector.broadcast %10 : vector<8x1xf32> to vector<8x32xf32>
    %12 = arith.subf %6, %11 : vector<8x32xf32>
    %13 = arith.mulf %12, %12 : vector<8x32xf32>
    %cst_3 = arith.constant dense<0.000000e+00> : vector<8xf32>
    %14 = vector.multi_reduction <add>, %13, %cst_3 [1] : vector<8x32xf32> to vector<8xf32>
    %15 = vector.shape_cast %14 : vector<8xf32> to vector<8x1xf32>
    %cst_4 = arith.constant 3.125000e-02 : f32
    %16 = vector.broadcast %cst_4 : f32 to vector<8x1xf32>
    %17 = arith.mulf %15, %16 : vector<8x1xf32>
    %cst_5 = arith.constant 9.99999974E-6 : f32
    %18 = vector.broadcast %cst_5 : f32 to vector<8x1xf32>
    %19 = arith.addf %17, %18 : vector<8x1xf32>
    %20 = math.rsqrt %19 : vector<8x1xf32>
    %21 = vector.broadcast %0 : f32 to vector<8x1xf32>
    %22 = arith.mulf %20, %21 : vector<8x1xf32>
    %23 = vector.broadcast %22 : vector<8x1xf32> to vector<8x32xf32>
    %24 = arith.mulf %12, %23 : vector<8x32xf32>
    %25 = vector.broadcast %1 : f32 to vector<8x32xf32>
    %26 = arith.addf %24, %25 : vector<8x32xf32>
    %c0_6 = arith.constant 0 : index
    %c0_7 = arith.constant 0 : index
    %27 = vector.load %arg3[%c0_6, %c0_7] : memref<32x128xf32, #tpu.memory_space<vmem>>, vector<32x128xf32>
    %cst_8 = arith.constant dense<0.000000e+00> : vector<8x128xf32>
    %28 = tpu.matmul %26, %27, %cst_8 {dimension_numbers = #tpu.dot_dimension_numbers<[1], [0], [0], [1], [0, 0, 1, 1], [], []>} : vector<8x32xf32>, vector<32x128xf32>, vector<8x128xf32> -> vector<8x128xf32>
    %c0_9 = arith.constant 0 : index
    %c0_10 = arith.constant 0 : index
    %29 = vector.load %arg4[%c0_9, %c0_10] : memref<1x128xf32, #tpu.memory_space<vmem>>, vector<1x128xf32>
    %30 = vector.broadcast %29 : vector<1x128xf32> to vector<8x128xf32>
    %31 = arith.addf %28, %30 : vector<8x128xf32>
    %cst_11 = arith.constant 0.000000e+00 : f32
    %32 = vector.broadcast %cst_11 : f32 to vector<8x128xf32>
    %33 = arith.maximumf %31, %32 : vector<8x128xf32>
    %cst_12 = arith.constant dense<0.000000e+00> : vector<8xf32>
    %34 = vector.multi_reduction <add>, %33, %cst_12 [1] : vector<8x128xf32> to vector<8xf32>
    %35 = vector.shape_cast %34 : vector<8xf32> to vector<8x1xf32>
    %cst_13 = arith.constant 7.812500e-03 : f32
    %36 = vector.broadcast %cst_13 : f32 to vector<8x1xf32>
    %37 = arith.mulf %35, %36 : vector<8x1xf32>
    %38 = vector.broadcast %37 : vector<8x1xf32> to vector<8x128xf32>
    %39 = arith.subf %33, %38 : vector<8x128xf32>
    %40 = arith.mulf %39, %39 : vector<8x128xf32>
    %cst_14 = arith.constant dense<0.000000e+00> : vector<8xf32>
    %41 = vector.multi_reduction <add>, %40, %cst_14 [1] : vector<8x128xf32> to vector<8xf32>
    %42 = vector.shape_cast %41 : vector<8xf32> to vector<8x1xf32>
    %cst_15 = arith.constant 7.812500e-03 : f32
    %43 = vector.broadcast %cst_15 : f32 to vector<8x1xf32>
    %44 = arith.mulf %42, %43 : vector<8x1xf32>
    %cst_16 = arith.constant 9.99999974E-6 : f32
    %45 = vector.broadcast %cst_16 : f32 to vector<8x1xf32>
    %46 = arith.addf %44, %45 : vector<8x1xf32>
    %47 = math.rsqrt %46 : vector<8x1xf32>
    %48 = vector.broadcast %2 : f32 to vector<8x1xf32>
    %49 = arith.mulf %47, %48 : vector<8x1xf32>
    %50 = vector.broadcast %49 : vector<8x1xf32> to vector<8x128xf32>
    %51 = arith.mulf %39, %50 : vector<8x128xf32>
    %52 = vector.broadcast %3 : f32 to vector<8x128xf32>
    %53 = arith.addf %51, %52 : vector<8x128xf32>
    %c0_17 = arith.constant 0 : index
    %c0_18 = arith.constant 0 : index
    %54 = vector.load %arg5[%c0_17, %c0_18] : memref<128x128xf32, #tpu.memory_space<vmem>>, vector<128x128xf32>
    %cst_19 = arith.constant dense<0.000000e+00> : vector<8x128xf32>
    %55 = tpu.matmul %53, %54, %cst_19 {dimension_numbers = #tpu.dot_dimension_numbers<[1], [0], [0], [1], [0, 0, 1, 1], [], []>} : vector<8x128xf32>, vector<128x128xf32>, vector<8x128xf32> -> vector<8x128xf32>
    %c0_20 = arith.constant 0 : index
    %c0_21 = arith.constant 0 : index
    %56 = vector.load %arg6[%c0_20, %c0_21] : memref<1x128xf32, #tpu.memory_space<vmem>>, vector<1x128xf32>
    %57 = vector.broadcast %56 : vector<1x128xf32> to vector<8x128xf32>
    %58 = arith.addf %55, %57 : vector<8x128xf32>
    %cst_22 = arith.constant 0.000000e+00 : f32
    %59 = vector.broadcast %cst_22 : f32 to vector<8x128xf32>
    %60 = arith.maximumf %58, %59 : vector<8x128xf32>
    %cst_23 = arith.constant dense<0.000000e+00> : vector<8xf32>
    %61 = vector.multi_reduction <add>, %60, %cst_23 [1] : vector<8x128xf32> to vector<8xf32>
    %62 = vector.shape_cast %61 : vector<8xf32> to vector<8x1xf32>
    %cst_24 = arith.constant 7.812500e-03 : f32
    %63 = vector.broadcast %cst_24 : f32 to vector<8x1xf32>
    %64 = arith.mulf %62, %63 : vector<8x1xf32>
    %65 = vector.broadcast %64 : vector<8x1xf32> to vector<8x128xf32>
    %66 = arith.subf %60, %65 : vector<8x128xf32>
    %67 = arith.mulf %66, %66 : vector<8x128xf32>
    %cst_25 = arith.constant dense<0.000000e+00> : vector<8xf32>
    %68 = vector.multi_reduction <add>, %67, %cst_25 [1] : vector<8x128xf32> to vector<8xf32>
    %69 = vector.shape_cast %68 : vector<8xf32> to vector<8x1xf32>
    %cst_26 = arith.constant 7.812500e-03 : f32
    %70 = vector.broadcast %cst_26 : f32 to vector<8x1xf32>
    %71 = arith.mulf %69, %70 : vector<8x1xf32>
    %cst_27 = arith.constant 9.99999974E-6 : f32
    %72 = vector.broadcast %cst_27 : f32 to vector<8x1xf32>
    %73 = arith.addf %71, %72 : vector<8x1xf32>
    %74 = math.rsqrt %73 : vector<8x1xf32>
    %75 = vector.broadcast %4 : f32 to vector<8x1xf32>
    %76 = arith.mulf %74, %75 : vector<8x1xf32>
    %77 = vector.broadcast %76 : vector<8x1xf32> to vector<8x128xf32>
    %78 = arith.mulf %66, %77 : vector<8x128xf32>
    %79 = vector.broadcast %5 : f32 to vector<8x128xf32>
    %80 = arith.addf %78, %79 : vector<8x128xf32>
    %c0_28 = arith.constant 0 : index
    %c0_29 = arith.constant 0 : index
    %81 = vector.load %arg7[%c0_28, %c0_29] : memref<128x16xf32, #tpu.memory_space<vmem>>, vector<128x16xf32>
    %cst_30 = arith.constant dense<0.000000e+00> : vector<8x16xf32>
    %82 = tpu.matmul %80, %81, %cst_30 {dimension_numbers = #tpu.dot_dimension_numbers<[1], [0], [0], [1], [0, 0, 1, 1], [], []>} : vector<8x128xf32>, vector<128x16xf32>, vector<8x16xf32> -> vector<8x16xf32>
    %c0_31 = arith.constant 0 : index
    %c0_32 = arith.constant 0 : index
    %83 = vector.load %arg8[%c0_31, %c0_32] : memref<1x16xf32, #tpu.memory_space<vmem>>, vector<1x16xf32>
    %84 = vector.broadcast %83 : vector<1x16xf32> to vector<8x16xf32>
    %85 = arith.addf %82, %84 : vector<8x16xf32>
    %c0_33 = arith.constant 0 : index
    %c0_34 = arith.constant 0 : index
    %86 = vector.load %arg9[%c0_33, %c0_34] : memref<8x16xf32, #tpu.memory_space<vmem>>, vector<8x16xf32>
    tpu.vector_store %arg9[%c0_33, %c0_34], %85 {strides = array<i32>} : memref<8x16xf32, #tpu.memory_space<vmem>>, vector<8x16xf32>,
    return
  }
  func.func @transform_0(%arg0: i32) -> i32 {
    %c0_i32 = arith.constant 0 : i32
    %c0_i32_0 = arith.constant 0 : i32
    return %c0_i32 : i32
  }
  func.func @transform_1(%arg0: i32) -> (i32, i32) {
    %c0_i32 = arith.constant 0 : i32
    %c0_i32_0 = arith.constant 0 : i32
    return %arg0, %c0_i32 : i32, i32
  }
  func.func @transform_2(%arg0: i32) -> (i32, i32) {
    %c0_i32 = arith.constant 0 : i32
    %c0_i32_0 = arith.constant 0 : i32
    %c0_i32_1 = arith.constant 0 : i32
    return %c0_i32, %c0_i32_0 : i32, i32
  }
  func.func @transform_3(%arg0: i32) -> (i32, i32) {
    %c0_i32 = arith.constant 0 : i32
    %c0_i32_0 = arith.constant 0 : i32
    %c0_i32_1 = arith.constant 0 : i32
    return %c0_i32, %c0_i32_0 : i32, i32
  }
  func.func @transform_4(%arg0: i32) -> (i32, i32) {
    %c0_i32 = arith.constant 0 : i32
    %c0_i32_0 = arith.constant 0 : i32
    %c0_i32_1 = arith.constant 0 : i32
    return %c0_i32, %c0_i32_0 : i32, i32
  }
  func.func @transform_5(%arg0: i32) -> (i32, i32) {
    %c0_i32 = arith.constant 0 : i32
    %c0_i32_0 = arith.constant 0 : i32
    %c0_i32_1 = arith.constant 0 : i32
    return %c0_i32, %c0_i32_0 : i32, i32
  }
  func.func @transform_6(%arg0: i32) -> (i32, i32) {
    %c0_i32 = arith.constant 0 : i32
    %c0_i32_0 = arith.constant 0 : i32
    %c0_i32_1 = arith.constant 0 : i32
    return %c0_i32, %c0_i32_0 : i32, i32
  }
  func.func @transform_7(%arg0: i32) -> (i32, i32) {
    %c0_i32 = arith.constant 0 : i32
    %c0_i32_0 = arith.constant 0 : i32
    %c0_i32_1 = arith.constant 0 : i32
    return %c0_i32, %c0_i32_0 : i32, i32
  }
  func.func @transform_8(%arg0: i32) -> (i32, i32) {
    %c0_i32 = arith.constant 0 : i32
    %c0_i32_0 = arith.constant 0 : i32
    return %arg0, %c0_i32 : i32, i32
  }
}

</mosaic_0001>

<llo_original>
// kernel: dni_linear_forward.1
$region0: #{dni_linear_forward.1}
  #allocation0 [shape = 'u32[]', space=smem, size = 0x4, offset = 0x4, fixed_abs, tag = 'smem constant byte address 0x4 - core index']
  #allocation1 [shape = 'u32[144,128]{1,0:T(1,128)}', space=vmem, size = 0x12000, scoped, tag = 'internal scratch']
  %s0 = inlined_call_operand.vmem [shape: f32[6], index: 0, kind: input, shape index: {}]
  %s1 = inlined_call_operand.hbm [shape: f32[16,32], index: 1, kind: input, shape index: {}]
  %s2 = inlined_call_operand.vmem [shape: f32[32,128], index: 2, kind: input, shape index: {}]
  %s3 = inlined_call_operand.vmem [shape: f32[1,128], index: 3, kind: input, shape index: {}]
  %s4 = inlined_call_operand.vmem [shape: f32[128,128], index: 4, kind: input, shape index: {}]
  %s5 = inlined_call_operand.vmem [shape: f32[1,128], index: 5, kind: input, shape index: {}]
  %s6 = inlined_call_operand.vmem [shape: f32[128,16], index: 6, kind: input, shape index: {}]
  %s7 = inlined_call_operand.vmem [shape: f32[1,16], index: 7, kind: input, shape index: {}]
  %s8 = inlined_call_operand.hbm [shape: f32[16,16], index: 8, kind: output, shape index: {}]
  %s9 = sld [smem:[#allocation0]]
  $region73: #{dni_linear_forward.1} parent=0
    _
  %s11 = ssub.s32 1, %s9
  %s12 = scalar_select 0, %s11, %s9
  $region1: #{dni_linear_forward.1} parent=0
    #allocation2 [shape = 'u8[512]{0}', space=smem, size = 0x200, scoped, tag = 'input window, operand 0, single buffered']
    #allocation3 [shape = 's32[2]{0}', space=sflag, size = 0x8, scoped, tag = 'scoped memory for dni_linear_forward.1']
    #allocation4 [shape = 's32[2]{0}', space=sflag, size = 0x8, scoped, tag = 'scoped memory for dni_linear_forward.1']
    #allocation5 [shape = 's32[2]{0}', space=sflag, size = 0x8, scoped, tag = 'scoped memory for dni_linear_forward.1']
    #allocation6 [shape = 'u8[8192]{0}', space=vmem, size = 0x2000, scoped, tag = 'input window, operand 1']
    #allocation7 [shape = 'u8[8192]{0}', space=vmem, size = 0x2000, scoped, tag = 'output window, operand 0']
    %13 = vsyncpa [#allocation5], 0
    %14 = vsyncpa [#allocation3], 0
    %s15 = scalar_lea.sflag [#allocation3], 1
    %16 = vsyncpa %s15, 0
    %17 = vsyncpa [#allocation4], 0
    %s18 = scalar_lea.sflag [#allocation4], 1
    %19 = vsyncpa %s18, 0
    loop: start=0, step=1, limit=4
    $region2: #{dni_linear_forward.1} parent=1 // loop_pre_header
      _
    $region3: #{dni_linear_forward.1} parent=1 // loop_header
      %s21 = sphi 0, %s25
      %p22 = scmp.ge.s32.totalorder %s21, 4
      %s29 = sphi 0, %s29
      %s31 = sphi 0, %s29
      %s32 = sphi 0, %s31
      %s46 = sphi 0, %s32
      %s52 = sphi 0, %s54
      %s55 = sphi 0, %s52
      %s56 = sphi 0, %s55
      %s72 = sphi 0, %s56
      %s76 = sphi 0, %s76
      %s78 = sphi 0, %s76
      %s79 = sphi 0, %s78
      %s93 = sphi 0, %s79
      %s97 = sphi 0, %s97
      %s99 = sphi 0, %s97
      %s100 = sphi 0, %s99
      %s114 = sphi 0, %s100
      %s118 = sphi 0, %s118
      %s120 = sphi 0, %s118
      %s121 = sphi 0, %s120
      %s135 = sphi 0, %s121
      %s139 = sphi 0, %s139
      %s141 = sphi 0, %s139
      %s142 = sphi 0, %s141
      %s156 = sphi 0, %s142
      %s160 = sphi 0, %s160
      %s162 = sphi 0, %s160
      %s163 = sphi 0, %s162
      %s177 = sphi 0, %s163
      %s181 = sphi 0, %s181
      %s183 = sphi 0, %s181
      %s184 = sphi 0, %s183
      %s198 = sphi 0, %s184
      %s204 = sphi 0, %s206
      %s207 = sphi 0, %s204
      %s208 = sphi 0, %s207
      %s224 = sphi 0, %s208
    $region4: #{dni_linear_forward.1} parent=1 // loop_header_branch
      %24 = sbr.rel (%p22) target = $region8
    $region5: #{dni_linear_forward.1} parent=1 // loop_body
      %s26 = ssub.s32 %s21, 1
      %s27 = ssub.s32 %s21, 2
      %s28 = sadd.s32 %s21, 1
      %s30 = sadd.s32 %s29, 1
      %p33 = scmp.eq.s32.totalorder %s21, 1
      %p34 = scmp.ne.s32.totalorder %s29, %s31
      %p35 = scmp.eq.s32.totalorder %s21, 0
      %p36 = por %p34, %p35
      %p37 = scmp.ne.s32.totalorder %s29, %s31
      %p38 = scmp.eq.s32.totalorder %s26, 1
      %p39 = por %p37, %p38
      %p40 = scmp.ne.s32.totalorder %s31, %s32
      %p41 = scmp.eq.s32.totalorder %s26, 0
      %p42 = por %p40, %p41
      %p43 = scmp.ne.s32.totalorder %s31, %s32
      %p44 = scmp.eq.s32.totalorder %s27, 1
      %p45 = por %p43, %p44
      %p47 = scmp.ne.s32.totalorder %s32, %s46
      %p48 = scmp.eq.s32.totalorder %s27, 0
      %p49 = por %p47, %p48
      %s50 = ssub.s32 %s21, %s28
      %p51 = scmp.eq.s32.totalorder %s50, 0
      %s53 = sadd.s32 %s52, 1
      %s54 = scalar_select %p51, %s52, %s53
      %p57 = pneg %p51
      %p58 = scmp.eq.s32.totalorder %s21, 1
      %p59 = por %p57, %p58
      %p60 = scmp.ne.s32.totalorder %s52, %s55
      %p61 = scmp.eq.s32.totalorder %s21, 0
      %p62 = por %p60, %p61
      %p63 = scmp.ne.s32.totalorder %s52, %s55
      %p64 = scmp.eq.s32.totalorder %s26, 1
      %p65 = por %p63, %p64
      %p66 = scmp.ne.s32.totalorder %s55, %s56
      %p67 = scmp.eq.s32.totalorder %s26, 0
      %p68 = por %p66, %p67
      %p69 = scmp.ne.s32.totalorder %s55, %s56
      %p70 = scmp.eq.s32.totalorder %s27, 1
      %p71 = por %p69, %p70
      %p73 = scmp.ne.s32.totalorder %s56, %s72
      %p74 = scmp.eq.s32.totalorder %s27, 0
      %p75 = por %p73, %p74
      %s77 = sadd.s32 %s76, 1
      %p80 = scmp.eq.s32.totalorder %s21, 1
      %p81 = scmp.ne.s32.totalorder %s76, %s78
      %p82 = scmp.eq.s32.totalorder %s21, 0
      %p83 = por %p81, %p82
      %p84 = scmp.ne.s32.totalorder %s76, %s78
      %p85 = scmp.eq.s32.totalorder %s26, 1
      %p86 = por %p84, %p85
      %p87 = scmp.ne.s32.totalorder %s78, %s79
      %p88 = scmp.eq.s32.totalorder %s26, 0
      %p89 = por %p87, %p88
      %p90 = scmp.ne.s32.totalorder %s78, %s79
      %p91 = scmp.eq.s32.totalorder %s27, 1
      %p92 = por %p90, %p91
      %p94 = scmp.ne.s32.totalorder %s79, %s93
      %p95 = scmp.eq.s32.totalorder %s27, 0
      %p96 = por %p94, %p95
      %s98 = sadd.s32 %s97, 1
      %p101 = scmp.eq.s32.totalorder %s21, 1
      %p102 = scmp.ne.s32.totalorder %s97, %s99
      %p103 = scmp.eq.s32.totalorder %s21, 0
      %p104 = por %p102, %p103
      %p105 = scmp.ne.s32.totalorder %s97, %s99
      %p106 = scmp.eq.s32.totalorder %s26, 1
      %p107 = por %p105, %p106
      %p108 = scmp.ne.s32.totalorder %s99, %s100
      %p109 = scmp.eq.s32.totalorder %s26, 0
      %p110 = por %p108, %p109
      %p111 = scmp.ne.s32.totalorder %s99, %s100
      %p112 = scmp.eq.s32.totalorder %s27, 1
      %p113 = por %p111, %p112
      %p115 = scmp.ne.s32.totalorder %s100, %s114
      %p116 = scmp.eq.s32.totalorder %s27, 0
      %p117 = por %p115, %p116
      %s119 = sadd.s32 %s118, 1
      %p122 = scmp.eq.s32.totalorder %s21, 1
      %p123 = scmp.ne.s32.totalorder %s118, %s120
      %p124 = scmp.eq.s32.totalorder %s21, 0
      %p125 = por %p123, %p124
      %p126 = scmp.ne.s32.totalorder %s118, %s120
      %p127 = scmp.eq.s32.totalorder %s26, 1
      %p128 = por %p126, %p127
      %p129 = scmp.ne.s32.totalorder %s120, %s121
      %p130 = scmp.eq.s32.totalorder %s26, 0
      %p131 = por %p129, %p130
      %p132 = scmp.ne.s32.totalorder %s120, %s121
      %p133 = scmp.eq.s32.totalorder %s27, 1
      %p134 = por %p132, %p133
      %p136 = scmp.ne.s32.totalorder %s121, %s135
      %p137 = scmp.eq.s32.totalorder %s27, 0
      %p138 = por %p136, %p137
      %s140 = sadd.s32 %s139, 1
      %p143 = scmp.eq.s32.totalorder %s21, 1
      %p144 = scmp.ne.s32.totalorder %s139, %s141
      %p145 = scmp.eq.s32.totalorder %s21, 0
      %p146 = por %p144, %p145
      %p147 = scmp.ne.s32.totalorder %s139, %s141
      %p148 = scmp.eq.s32.totalorder %s26, 1
      %p149 = por %p147, %p148
      %p150 = scmp.ne.s32.totalorder %s141, %s142
      %p151 = scmp.eq.s32.totalorder %s26, 0
      %p152 = por %p150, %p151
      %p153 = scmp.ne.s32.totalorder %s141, %s142
      %p154 = scmp.eq.s32.totalorder %s27, 1
      %p155 = por %p153, %p154
      %p157 = scmp.ne.s32.totalorder %s142, %s156
      %p158 = scmp.eq.s32.totalorder %s27, 0
      %p159 = por %p157, %p158
      %s161 = sadd.s32 %s160, 1
      %p164 = scmp.eq.s32.totalorder %s21, 1
      %p165 = scmp.ne.s32.totalorder %s160, %s162
      %p166 = scmp.eq.s32.totalorder %s21, 0
      %p167 = por %p165, %p166
      %p168 = scmp.ne.s32.totalorder %s160, %s162
      %p169 = scmp.eq.s32.totalorder %s26, 1
      %p170 = por %p168, %p169
      %p171 = scmp.ne.s32.totalorder %s162, %s163
      %p172 = scmp.eq.s32.totalorder %s26, 0
      %p173 = por %p171, %p172
      %p174 = scmp.ne.s32.totalorder %s162, %s163
      %p175 = scmp.eq.s32.totalorder %s27, 1
      %p176 = por %p174, %p175
      %p178 = scmp.ne.s32.totalorder %s163, %s177
      %p179 = scmp.eq.s32.totalorder %s27, 0
      %p180 = por %p178, %p179
      %s182 = sadd.s32 %s181, 1
      %p185 = scmp.eq.s32.totalorder %s21, 1
      %p186 = scmp.ne.s32.totalorder %s181, %s183
      %p187 = scmp.eq.s32.totalorder %s21, 0
      %p188 = por %p186, %p187
      %p189 = scmp.ne.s32.totalorder %s181, %s183
      %p190 = scmp.eq.s32.totalorder %s26, 1
      %p191 = por %p189, %p190
      %p192 = scmp.ne.s32.totalorder %s183, %s184
      %p193 = scmp.eq.s32.totalorder %s26, 0
      %p194 = por %p192, %p193
      %p195 = scmp.ne.s32.totalorder %s183, %s184
      %p196 = scmp.eq.s32.totalorder %s27, 1
      %p197 = por %p195, %p196
      %p199 = scmp.ne.s32.totalorder %s184, %s198
      %p200 = scmp.eq.s32.totalorder %s27, 0
      %p201 = por %p199, %p200
      %s202 = ssub.s32 %s21, %s28
      %p203 = scmp.eq.s32.totalorder %s202, 0
      %s205 = sadd.s32 %s204, 1
      %s206 = scalar_select %p203, %s204, %s205
      %p209 = pneg %p203
      %p210 = scmp.eq.s32.totalorder %s21, 1
      %p211 = por %p209, %p210
      %p212 = scmp.ne.s32.totalorder %s204, %s207
      %p213 = scmp.eq.s32.totalorder %s21, 0
      %p214 = por %p212, %p213
      %p215 = scmp.ne.s32.totalorder %s204, %s207
      %p216 = scmp.eq.s32.totalorder %s26, 1
      %p217 = por %p215, %p216
      %p218 = scmp.ne.s32.totalorder %s207, %s208
      %p219 = scmp.eq.s32.totalorder %s26, 0
      %p220 = por %p218, %p219
      %p221 = scmp.ne.s32.totalorder %s207, %s208
      %p222 = scmp.eq.s32.totalorder %s27, 1
      %p223 = por %p221, %p222
      %p225 = scmp.ne.s32.totalorder %s208, %s224
      %p226 = scmp.eq.s32.totalorder %s27, 0
      %p227 = por %p225, %p226
      %p228 = scmp.le.s32.totalorder 1, %s21
      %p229 = scmp.lt.s32.totalorder %s21, 3
      %p230 = pnand %p228, %p229
      %p231 = pneg %p230
      // Predicated region
      $region9: #{dni_linear_forward.1} parent=5 // pred_check
        _
      $region10: #{dni_linear_forward.1} parent=5 // pred_check_branch
        %233 = sbr.rel (%p230) target = $region12
      $region11: #{dni_linear_forward.1} parent=5 // pred_region
        %s234 = ssub.s32 %s21, 1
        // Predicated region
        $region13: #{dni_linear_forward.1} parent=11 // pred_check
          %p235 = pneg %p42
        $region14: #{dni_linear_forward.1} parent=11 // pred_check_branch
          %237 = sbr.rel (%p235) target = $region16
        $region15: #{dni_linear_forward.1} parent=11 // pred_region
          %s239 = ssub.s32 16, 16
          %240 = vsyncadd [#allocation5], %s239
          %s242 = sshll.u32 %s0, 4
          %s243 = int_to_ptr.vmem [resolvable:$true] %s242
          %245 = dma.vmem_to_smem %s243, 16, [#allocation2], [#allocation5]
        $region16: #{dni_linear_forward.1} parent=11 // pred_fallthru
          _
        // Predicated region
        $region17: #{dni_linear_forward.1} parent=11 // pred_check
          %p246 = pneg %p89
        $region18: #{dni_linear_forward.1} parent=11 // pred_check_branch
          %248 = sbr.rel (%p246) target = $region20
        $region19: #{dni_linear_forward.1} parent=11 // pred_region
          _
        $region20: #{dni_linear_forward.1} parent=11 // pred_fallthru
          _
        // Predicated region
        $region21: #{dni_linear_forward.1} parent=11 // pred_check
          %p249 = pneg %p110
        $region22: #{dni_linear_forward.1} parent=11 // pred_check_branch
          %251 = sbr.rel (%p249) target = $region24
        $region23: #{dni_linear_forward.1} parent=11 // pred_region
          _
        $region24: #{dni_linear_forward.1} parent=11 // pred_fallthru
          _
        // Predicated region
        $region25: #{dni_linear_forward.1} parent=11 // pred_check
          %p252 = pneg %p131
        $region26: #{dni_linear_forward.1} parent=11 // pred_check_branch
          %254 = sbr.rel (%p252) target = $region28
        $region27: #{dni_linear_forward.1} parent=11 // pred_region
          _
        $region28: #{dni_linear_forward.1} parent=11 // pred_fallthru
          _
        // Predicated region
        $region29: #{dni_linear_forward.1} parent=11 // pred_check
          %p255 = pneg %p152
        $region30: #{dni_linear_forward.1} parent=11 // pred_check_branch
          %257 = sbr.rel (%p255) target = $region32
        $region31: #{dni_linear_forward.1} parent=11 // pred_region
          _
        $region32: #{dni_linear_forward.1} parent=11 // pred_fallthru
          _
        // Predicated region
        $region33: #{dni_linear_forward.1} parent=11 // pred_check
          %p258 = pneg %p173
        $region34: #{dni_linear_forward.1} parent=11 // pred_check_branch
          %260 = sbr.rel (%p258) target = $region36
        $region35: #{dni_linear_forward.1} parent=11 // pred_region
          _
        $region36: #{dni_linear_forward.1} parent=11 // pred_fallthru
          _
        // Predicated region
        $region37: #{dni_linear_forward.1} parent=11 // pred_check
          %p261 = pneg %p194
        $region38: #{dni_linear_forward.1} parent=11 // pred_check_branch
          %263 = sbr.rel (%p261) target = $region40
        $region39: #{dni_linear_forward.1} parent=11 // pred_region
          _
        $region40: #{dni_linear_forward.1} parent=11 // pred_fallthru
          _
      $region12: #{dni_linear_forward.1} parent=5 // pred_fallthru
        _
      %p264 = scmp.lt.s32.totalorder %s21, 2
      // Predicated region
      $region41: #{dni_linear_forward.1} parent=5 // pred_check
        %p265 = pneg %p264
      $region42: #{dni_linear_forward.1} parent=5 // pred_check_branch
        %267 = sbr.rel (%p265) target = $region44
      $region43: #{dni_linear_forward.1} parent=5 // pred_region
        // Predicated region
        $region45: #{dni_linear_forward.1} parent=43 // pred_check
          %p268 = pneg %p62
        $region46: #{dni_linear_forward.1} parent=43 // pred_check_branch
          %270 = sbr.rel (%p268) target = $region48
        $region47: #{dni_linear_forward.1} parent=43 // pred_region
          %s271 = sand.u32 %s52, 1
          %s272 = scalar_lea.sflag [#allocation3], %s271
          %s273 = sand.u32 %s52, 1
          %s274 = smul.addr %s273, 8
          %s275 = scalar_lea.vmem [#allocation6], %s274
          %s277 = ssub.s32 128, 128
          %278 = vsyncadd %s272, %s277
          %s279 = smul.addr %s21, 128
          %s280 = scalar_lea.hbm %s1, %s279
          %s282 = sshll.u32 %s275, 4
          %s283 = int_to_ptr.vmem [resolvable:$true] %s282
          %285 = dma.hbm_to_vmem [thread:$0]  %s280, 128, %s283, %s272
        $region48: #{dni_linear_forward.1} parent=43 // pred_fallthru
          _
      $region44: #{dni_linear_forward.1} parent=5 // pred_fallthru
        _
      %p286 = scmp.le.s32.totalorder 1, %s21
      %p287 = scmp.lt.s32.totalorder %s21, 3
      %p288 = pnand %p286, %p287
      %p289 = pneg %p288
      // Predicated region
      $region49: #{dni_linear_forward.1} parent=5 // pred_check
        _
      $region50: #{dni_linear_forward.1} parent=5 // pred_check_branch
        %291 = sbr.rel (%p288) target = $region52
      $region51: #{dni_linear_forward.1} parent=5 // pred_region
        %s292 = ssub.s32 %s21, 1
        // Predicated region
        $region53: #{dni_linear_forward.1} parent=51 // pred_check
          %p293 = pneg %p42
        $region54: #{dni_linear_forward.1} parent=51 // pred_check_branch
          %295 = sbr.rel (%p293) target = $region56
        $region55: #{dni_linear_forward.1} parent=51 // pred_region
          %296 = dma.done [#allocation5], 16
        $region56: #{dni_linear_forward.1} parent=51 // pred_fallthru
          _
        %s297 = sand.u32 %s55, 1
        %s298 = scalar_lea.sflag [#allocation3], %s297
        %s299 = sand.u32 %s55, 1
        %s300 = smul.addr %s299, 8
        %s301 = scalar_lea.vmem [#allocation6], %s300
        // Predicated region
        $region57: #{dni_linear_forward.1} parent=51 // pred_check
          %p302 = pneg %p68
        $region58: #{dni_linear_forward.1} parent=51 // pred_check_branch
          %304 = sbr.rel (%p302) target = $region60
        $region59: #{dni_linear_forward.1} parent=51 // pred_region
          %305 = dma.done %s298, 128
        $region60: #{dni_linear_forward.1} parent=51 // pred_fallthru
          _
        %306 = sfence
        %p307 = pneg %p42
        %p308 = pneg %p39
        %s309 = sand.u32 %s55, 1
        %s310 = scalar_lea.sflag [#allocation3], %s309
        %s311 = sand.u32 %s55, 1
        %s312 = smul.addr %s311, 8
        %s313 = scalar_lea.vmem [#allocation6], %s312
        %p314 = pneg %p68
        %p315 = pneg %p65
        %p316 = pneg %p89
        %p317 = pneg %p86
        %p318 = pneg %p110
        %p319 = pneg %p107
        %p320 = pneg %p131
        %p321 = pneg %p128
        %p322 = pneg %p152
        %p323 = pneg %p149
        %p324 = pneg %p173
        %p325 = pneg %p170
        %p326 = pneg %p194
        %p327 = pneg %p191
        %p328 = pneg %p220
        %p329 = pneg %p217
        %s330 = sand.u32 %s207, 1
        %s331 = scalar_lea.sflag [#allocation4], %s330
        %s332 = sand.u32 %s207, 1
        %s333 = smul.addr %s332, 8
        %s334 = scalar_lea.vmem [#allocation7], %s333
        %s335 = sld [smem:[#allocation2]]
        %s336 = sld [smem:[#allocation2 + $0x1]]
        %s337 = sld [smem:[#allocation2 + $0x2]]
        %s338 = sld [smem:[#allocation2 + $0x3]]
        %s339 = sld [smem:[#allocation2 + $0x4]]
        %s340 = sld [smem:[#allocation2 + $0x5]]
        %v341 = vld [vmem:[%s301] sm:$0xff]
        %vm342 = vcmask 261120
        %v343 = vsel %vm342, %v341, 0.0
        %344 = vadd.xlane.f32.xlu0 %v343
        %v345 = vpop.xlane.xlu0 %344
        %v346 = vmul.f32 %v345, 0.03125
        %v347 = vsub.f32 %v341, %v346
        %v348 = vmul.f32 %v347, %v347
        %v349 = vsel %vm342, %v348, 0.0
        %350 = vadd.xlane.f32.xlu0 %v349
        %v351 = vpop.xlane.xlu0 %350
        %v352 = vmul.f32 %v351, 0.03125
        %v353 = vadd.f32 %v352, 1e-05
        %v354 = vrsqrt.pop %v353
        %v355 = vstv %s335
        %v356 = vmul.f32 %v354, %v355
        %v357 = vmul.f32 %v347, %v356
        %v358 = vstv %s336
        %v359 = vadd.f32 %v357, %v358
        %v360 = vld [vmem:[%s2] sm:$0xff]
        %v361 = vld [vmem:[%s2 + $0x8] sm:$0xff]
        %v362 = vld [vmem:[%s2 + $0x10] sm:$0xff]
        %v363 = vld [vmem:[%s2 + $0x18] sm:$0xff]
        %v364 = vld [vmem:[%s3] sm:$0x1]
        %v366 = vlaneseq
        %v367 = vshrl.u32 %v366, 7
        %v368 = vsub.s32 0, %v367
        %v369 = vrot.slane %v364, %v368
        %v372 = vsel %vm342, %v359, 0
        %374 = vmatprep.subr.mxu0 0.0
        %375 = vmatpush1.msra.mxu0 %v360
        %376 = vmatprep.subr.mxu0 0.0
        %377 = vmatpush1.msra.mxu0 %v361
        %378 = vmatprep.subr.mxu0 0.0
        %379 = vmatpush1.msra.mxu0 %v362
        %380 = vmatprep.subr.mxu0 0.0
        %381 = vmatpush1.msra.mxu0 %v363
        %382 = vmatprep.subr.mxu0 0.0
        %383 = vmatpush1.msra.mxu0 0.0
        %384 = vmatprep.subr.mxu0 0.0
        %385 = vmatpush1.msra.mxu0 0.0
        %386 = vmatprep.subr.mxu0 0.0
        %387 = vmatpush1.msra.mxu0 0.0
        %388 = vmatprep.subr.mxu0 0.0
        %389 = vmatpush1.msra.mxu0 0.0
        %390 = vmatprep.subr.mxu0 0.0
        %391 = vmatpush1.msra.mxu0 0.0
        %392 = vmatprep.subr.mxu0 0.0
        %393 = vmatpush1.msra.mxu0 0.0
        %394 = vmatprep.subr.mxu0 0.0
        %395 = vmatpush1.msra.mxu0 0.0
        %396 = vmatprep.subr.mxu0 0.0
        %397 = vmatpush1.msra.mxu0 0.0
        %398 = vmatprep.subr.mxu0 0.0
        %399 = vmatpush1.msra.mxu0 0.0
        %400 = vmatprep.subr.mxu0 0.0
        %401 = vmatpush1.msra.mxu0 0.0
        %402 = vmatprep.subr.mxu0 0.0
        %403 = vmatpush1.msra.mxu0 0.0
        %404 = vmatprep.subr.mxu0 0.0
        %405 = vmatpush1.msra.mxu0 0.0
        %406 = vmatprep.subr.mxu0 0.0
        %407 = vmatpush1.msra.mxu0 0.0
        %408 = vmatprep.subr.mxu0 0.0
        %409 = vmatpush1.msra.mxu0 0.0
        %410 = vmatprep.subr.mxu0 0.0
        %411 = vmatpush1.msra.mxu0 0.0
        %412 = vmatprep.subr.mxu0 0.0
        %413 = vmatpush1.msra.mxu0 0.0
        %414 = vmatprep.subr.mxu0 0.0
        %415 = vmatpush1.msra.mxu0 0.0
        %416 = vmatprep.subr.mxu0 0.0
        %417 = vmatpush1.msra.mxu0 0.0
        %418 = vmatprep.subr.mxu0 0.0
        %419 = vmatpush1.msra.mxu0 0.0
        %420 = vmatprep.subr.mxu0 0.0
        %421 = vmatpush1.msra.mxu0 0.0
        %422 = vmatprep.subr.mxu0 0.0
        %423 = vmatpush1.msra.mxu0 0.0
        %424 = vmatprep.subr.mxu0 0.0
        %425 = vmatpush1.msra.mxu0 0.0
        %426 = vmatprep.subr.mxu0 0.0
        %427 = vmatpush1.msra.mxu0 0.0
        %428 = vmatprep.subr.mxu0 0.0
        %429 = vmatpush1.msra.mxu0 0.0
        %430 = vmatprep.subr.mxu0 0.0
        %431 = vmatpush1.msra.mxu0 0.0
        %432 = vmatprep.subr.mxu0 0.0
        %433 = vmatpush1.msra.mxu0 0.0
        %434 = vmatprep.subr.mxu0 0.0
        %435 = vmatpush1.msra.mxu0 0.0
        %436 = vmatprep.subr.mxu0 0.0
        %437 = vmatpush1.msra.mxu0 0.0
        %438 = vmatprep.mubr.f32.mxu0 0.0
        %439 = vmatmul.mubr.f32.gmra.mrb[0].mxu0 %v372
        %v440 = vpop.f32.mrb[0].mxu0
        %v441 = vadd.f32 %v369, %v440
        %v442 = vpop.f32.mrb[0].mxu0
        %443 = vdwg.mxu0
        %v444 = vmax.f32 %v441, 0.0
        %445 = vadd.xlane.f32.xlu0 %v444
        %v446 = vpop.xlane.xlu0 %445
        %v447 = vmul.f32 %v446, 0.0078125
        %v448 = vsub.f32 %v444, %v447
        %v449 = vmul.f32 %v448, %v448
        %450 = vadd.xlane.f32.xlu0 %v449
        %v451 = vpop.xlane.xlu0 %450
        %v452 = vmul.f32 %v451, 0.0078125
        %v453 = vadd.f32 %v452, 1e-05
        %v454 = vrsqrt.pop %v453
        %v455 = vstv %s337
        %v456 = vmul.f32 %v454, %v455
        %v457 = vmul.f32 %v448, %v456
        %v458 = vstv %s338
        %v459 = vadd.f32 %v457, %v458
        %v460 = vld [vmem:[%s4] sm:$0xff]
        %v461 = vld [vmem:[%s4 + $0x8] sm:$0xff]
        %v462 = vld [vmem:[%s4 + $0x10] sm:$0xff]
        %v463 = vld [vmem:[%s4 + $0x18] sm:$0xff]
        %v464 = vld [vmem:[%s4 + $0x20] sm:$0xff]
        %v465 = vld [vmem:[%s4 + $0x28] sm:$0xff]
        %v466 = vld [vmem:[%s4 + $0x30] sm:$0xff]
        %v467 = vld [vmem:[%s4 + $0x38] sm:$0xff]
        %v468 = vld [vmem:[%s4 + $0x40] sm:$0xff]
        %v469 = vld [vmem:[%s4 + $0x48] sm:$0xff]
        %v470 = vld [vmem:[%s4 + $0x50] sm:$0xff]
        %v471 = vld [vmem:[%s4 + $0x58] sm:$0xff]
        %v472 = vld [vmem:[%s4 + $0x60] sm:$0xff]
        %v473 = vld [vmem:[%s4 + $0x68] sm:$0xff]
        %v474 = vld [vmem:[%s4 + $0x70] sm:$0xff]
        %v475 = vld [vmem:[%s4 + $0x78] sm:$0xff]
        %v476 = vld [vmem:[%s5] sm:$0x1]
        %v478 = vlaneseq
        %v479 = vshrl.u32 %v478, 7
        %v480 = vsub.s32 0, %v479
        %v481 = vrot.slane %v476, %v480
        %483 = vmatprep.subr.mxu0 0.0
        %484 = vmatpush1.msra.mxu0 %v460
        %485 = vmatprep.subr.mxu0 0.0
        %486 = vmatpush1.msra.mxu0 %v461
        %487 = vmatprep.subr.mxu0 0.0
        %488 = vmatpush1.msra.mxu0 %v462
        %489 = vmatprep.subr.mxu0 0.0
        %490 = vmatpush1.msra.mxu0 %v463
        %491 = vmatprep.subr.mxu0 0.0
        %492 = vmatpush1.msra.mxu0 %v464
        %493 = vmatprep.subr.mxu0 0.0
        %494 = vmatpush1.msra.mxu0 %v465
        %495 = vmatprep.subr.mxu0 0.0
        %496 = vmatpush1.msra.mxu0 %v466
        %497 = vmatprep.subr.mxu0 0.0
        %498 = vmatpush1.msra.mxu0 %v467
        %499 = vmatprep.subr.mxu0 0.0
        %500 = vmatpush1.msra.mxu0 %v468
        %501 = vmatprep.subr.mxu0 0.0
        %502 = vmatpush1.msra.mxu0 %v469
        %503 = vmatprep.subr.mxu0 0.0
        %504 = vmatpush1.msra.mxu0 %v470
        %505 = vmatprep.subr.mxu0 0.0
        %506 = vmatpush1.msra.mxu0 %v471
        %507 = vmatprep.subr.mxu0 0.0
        %508 = vmatpush1.msra.mxu0 %v472
        %509 = vmatprep.subr.mxu0 0.0
        %510 = vmatpush1.msra.mxu0 %v473
        %511 = vmatprep.subr.mxu0 0.0
        %512 = vmatpush1.msra.mxu0 %v474
        %513 = vmatprep.subr.mxu0 0.0
        %514 = vmatpush1.msra.mxu0 %v475
        %515 = vmatprep.subr.mxu0 0.0
        %516 = vmatpush1.msra.mxu0 0.0
        %517 = vmatprep.subr.mxu0 0.0
        %518 = vmatpush1.msra.mxu0 0.0
        %519 = vmatprep.subr.mxu0 0.0
        %520 = vmatpush1.msra.mxu0 0.0
        %521 = vmatprep.subr.mxu0 0.0
        %522 = vmatpush1.msra.mxu0 0.0
        %523 = vmatprep.subr.mxu0 0.0
        %524 = vmatpush1.msra.mxu0 0.0
        %525 = vmatprep.subr.mxu0 0.0
        %526 = vmatpush1.msra.mxu0 0.0
        %527 = vmatprep.subr.mxu0 0.0
        %528 = vmatpush1.msra.mxu0 0.0
        %529 = vmatprep.subr.mxu0 0.0
        %530 = vmatpush1.msra.mxu0 0.0
        %531 = vmatprep.subr.mxu0 0.0
        %532 = vmatpush1.msra.mxu0 0.0
        %533 = vmatprep.subr.mxu0 0.0
        %534 = vmatpush1.msra.mxu0 0.0
        %535 = vmatprep.subr.mxu0 0.0
        %536 = vmatpush1.msra.mxu0 0.0
        %537 = vmatprep.subr.mxu0 0.0
        %538 = vmatpush1.msra.mxu0 0.0
        %539 = vmatprep.subr.mxu0 0.0
        %540 = vmatpush1.msra.mxu0 0.0
        %541 = vmatprep.subr.mxu0 0.0
        %542 = vmatpush1.msra.mxu0 0.0
        %543 = vmatprep.subr.mxu0 0.0
        %544 = vmatpush1.msra.mxu0 0.0
        %545 = vmatprep.subr.mxu0 0.0
        %546 = vmatpush1.msra.mxu0 0.0
        %547 = vmatprep.mubr.f32.mxu0 0.0
        %548 = vmatmul.mubr.f32.gmra.mrb[0].mxu0 %v459
        %v549 = vpop.f32.mrb[0].mxu0
        %v550 = vadd.f32 %v481, %v549
        %v551 = vpop.f32.mrb[0].mxu0
        %552 = vdwg.mxu0
        %v553 = vmax.f32 %v550, 0.0
        %554 = vadd.xlane.f32.xlu0 %v553
        %v555 = vpop.xlane.xlu0 %554
        %v556 = vmul.f32 %v555, 0.0078125
        %v557 = vsub.f32 %v553, %v556
        %v558 = vmul.f32 %v557, %v557
        %559 = vadd.xlane.f32.xlu0 %v558
        %v560 = vpop.xlane.xlu0 %559
        %v561 = vmul.f32 %v560, 0.0078125
        %v562 = vadd.f32 %v561, 1e-05
        %v563 = vrsqrt.pop %v562
        %v564 = vstv %s339
        %v565 = vmul.f32 %v563, %v564
        %v566 = vmul.f32 %v557, %v565
        %v567 = vstv %s340
        %v568 = vadd.f32 %v566, %v567
        %v569 = vld [vmem:[%s6] sm:$0xff]
        %v570 = vld [vmem:[%s6 + $0x8] sm:$0xff]
        %v571 = vld [vmem:[%s6 + $0x10] sm:$0xff]
        %v572 = vld [vmem:[%s6 + $0x18] sm:$0xff]
        %v573 = vld [vmem:[%s6 + $0x20] sm:$0xff]
        %v574 = vld [vmem:[%s6 + $0x28] sm:$0xff]
        %v575 = vld [vmem:[%s6 + $0x30] sm:$0xff]
        %v576 = vld [vmem:[%s6 + $0x38] sm:$0xff]
        %v577 = vld [vmem:[%s6 + $0x40] sm:$0xff]
        %v578 = vld [vmem:[%s6 + $0x48] sm:$0xff]
        %v579 = vld [vmem:[%s6 + $0x50] sm:$0xff]
        %v580 = vld [vmem:[%s6 + $0x58] sm:$0xff]
        %v581 = vld [vmem:[%s6 + $0x60] sm:$0xff]
        %v582 = vld [vmem:[%s6 + $0x68] sm:$0xff]
        %v583 = vld [vmem:[%s6 + $0x70] sm:$0xff]
        %v584 = vld [vmem:[%s6 + $0x78] sm:$0xff]
        %v585 = vld [vmem:[%s7] sm:$0x1]
        %v587 = vlaneseq
        %v588 = vshrl.u32 %v587, 7
        %v589 = vsub.s32 0, %v588
        %v590 = vrot.slane %v585, %v589
        %592 = vmatprep.subr.mxu0 0.0
        %593 = vmatpush1.msra.mxu0 %v569
        %594 = vmatprep.subr.mxu0 0.0
        %595 = vmatpush1.msra.mxu0 %v570
        %596 = vmatprep.subr.mxu0 0.0
        %597 = vmatpush1.msra.mxu0 %v571
        %598 = vmatprep.subr.mxu0 0.0
        %599 = vmatpush1.msra.mxu0 %v572
        %600 = vmatprep.subr.mxu0 0.0
        %601 = vmatpush1.msra.mxu0 %v573
        %602 = vmatprep.subr.mxu0 0.0
        %603 = vmatpush1.msra.mxu0 %v574
        %604 = vmatprep.subr.mxu0 0.0
        %605 = vmatpush1.msra.mxu0 %v575
        %606 = vmatprep.subr.mxu0 0.0
        %607 = vmatpush1.msra.mxu0 %v576
        %608 = vmatprep.subr.mxu0 0.0
        %609 = vmatpush1.msra.mxu0 %v577
        %610 = vmatprep.subr.mxu0 0.0
        %611 = vmatpush1.msra.mxu0 %v578
        %612 = vmatprep.subr.mxu0 0.0
        %613 = vmatpush1.msra.mxu0 %v579
        %614 = vmatprep.subr.mxu0 0.0
        %615 = vmatpush1.msra.mxu0 %v580
        %616 = vmatprep.subr.mxu0 0.0
        %617 = vmatpush1.msra.mxu0 %v581
        %618 = vmatprep.subr.mxu0 0.0
        %619 = vmatpush1.msra.mxu0 %v582
        %620 = vmatprep.subr.mxu0 0.0
        %621 = vmatpush1.msra.mxu0 %v583
        %622 = vmatprep.subr.mxu0 0.0
        %623 = vmatpush1.msra.mxu0 %v584
        %624 = vmatprep.subr.mxu0 0.0
        %625 = vmatpush1.msra.mxu0 0.0
        %626 = vmatprep.subr.mxu0 0.0
        %627 = vmatpush1.msra.mxu0 0.0
        %628 = vmatprep.subr.mxu0 0.0
        %629 = vmatpush1.msra.mxu0 0.0
        %630 = vmatprep.subr.mxu0 0.0
        %631 = vmatpush1.msra.mxu0 0.0
        %632 = vmatprep.subr.mxu0 0.0
        %633 = vmatpush1.msra.mxu0 0.0
        %634 = vmatprep.subr.mxu0 0.0
        %635 = vmatpush1.msra.mxu0 0.0
        %636 = vmatprep.subr.mxu0 0.0
        %637 = vmatpush1.msra.mxu0 0.0
        %638 = vmatprep.subr.mxu0 0.0
        %639 = vmatpush1.msra.mxu0 0.0
        %640 = vmatprep.subr.mxu0 0.0
        %641 = vmatpush1.msra.mxu0 0.0
        %642 = vmatprep.subr.mxu0 0.0
        %643 = vmatpush1.msra.mxu0 0.0
        %644 = vmatprep.subr.mxu0 0.0
        %645 = vmatpush1.msra.mxu0 0.0
        %646 = vmatprep.subr.mxu0 0.0
        %647 = vmatpush1.msra.mxu0 0.0
        %648 = vmatprep.subr.mxu0 0.0
        %649 = vmatpush1.msra.mxu0 0.0
        %650 = vmatprep.subr.mxu0 0.0
        %651 = vmatpush1.msra.mxu0 0.0
        %652 = vmatprep.subr.mxu0 0.0
        %653 = vmatpush1.msra.mxu0 0.0
        %654 = vmatprep.subr.mxu0 0.0
        %655 = vmatpush1.msra.mxu0 0.0
        %656 = vmatprep.mubr.f32.mxu0 0.0
        %657 = vmatmul.mubr.f32.gmra.mrb[0].mxu0 %v568
        %v658 = vpop.f32.mrb[0].mxu0
        %v659 = vadd.f32 %v590, %v658
        %v660 = vpop.f32.mrb[0].mxu0
        %661 = vdwg.mxu0
        %vm662 = vcmask 130048
        %663 = vst.msk [vmem:[%s334] sm:$0xff] %vm662, %v659
        %s664 = sand.u32 %s207, 1
        %s665 = scalar_lea.sflag [#allocation4], %s664
        %s666 = sand.u32 %s207, 1
        %s667 = smul.addr %s666, 8
        %s668 = scalar_lea.vmem [#allocation7], %s667
        // Predicated region
        $region61: #{dni_linear_forward.1} parent=51 // pred_check
          %p669 = pneg %p217
        $region62: #{dni_linear_forward.1} parent=51 // pred_check_branch
          %671 = sbr.rel (%p669) target = $region64
        $region63: #{dni_linear_forward.1} parent=51 // pred_region
          %s673 = ssub.s32 128, 128
          %674 = vsyncadd %s665, %s673
          %s675 = smul.addr %s26, 128
          %s676 = scalar_lea.hbm %s8, %s675
          %s678 = sshll.u32 %s668, 4
          %s679 = int_to_ptr.vmem [resolvable:$true] %s678
          %681 = dma.vmem_to_hbm [thread:$0]  %s679, 128, %s676, %s665
        $region64: #{dni_linear_forward.1} parent=51 // pred_fallthru
          _
      $region52: #{dni_linear_forward.1} parent=5 // pred_fallthru
        _
      %p682 = scmp.le.s32.totalorder 2, %s21
      // Predicated region
      $region65: #{dni_linear_forward.1} parent=5 // pred_check
        %p683 = pneg %p682
      $region66: #{dni_linear_forward.1} parent=5 // pred_check_branch
        %685 = sbr.rel (%p683) target = $region68
      $region67: #{dni_linear_forward.1} parent=5 // pred_region
        %s686 = ssub.s32 %s21, 2
        // Predicated region
        $region69: #{dni_linear_forward.1} parent=67 // pred_check
          %p687 = pneg %p223
        $region70: #{dni_linear_forward.1} parent=67 // pred_check_branch
          %689 = sbr.rel (%p687) target = $region72
        $region71: #{dni_linear_forward.1} parent=67 // pred_region
          %s690 = sand.u32 %s208, 1
          %s691 = scalar_lea.sflag [#allocation4], %s690
          %s692 = sand.u32 %s208, 1
          %s693 = smul.addr %s692, 8
          %s694 = scalar_lea.vmem [#allocation7], %s693
          %695 = dma.done %s691, 128
        $region72: #{dni_linear_forward.1} parent=67 // pred_fallthru
          _
      $region68: #{dni_linear_forward.1} parent=5 // pred_fallthru
        _
    $region6: #{dni_linear_forward.1} parent=1 // loop_footer
      %s25 = sadd.s32 1, %s21
    $region7: #{dni_linear_forward.1} parent=1 // loop_footer_branch
      %20 = sbr.rel target = $region3
    $region8: #{dni_linear_forward.1} parent=1 // loop_exit
      _
    %696 = vsyncpa [#allocation3], 1
    %s697 = scalar_lea.sflag [#allocation3], 1
    %698 = vsyncpa %s697, 1
    %699 = vsyncpa [#allocation4], 1
    %s700 = scalar_lea.sflag [#allocation4], 1
    %701 = vsyncpa %s700, 1
    %702 = vsyncpa [#allocation5], 1
    %s703 = scalar_lea.sflag [#allocation5], 1
    %704 = vsyncpa %s703, 1

</llo_original>
